<compile_context>
chip_gen: v7x
topology: tpu7x:2x2x1
jax: 0.10.0
libtpu: 0.0.40
codegen_flags: <defaults>
</compile_context>

<pallas_src>
import functools

import jax
import jax.numpy as jnp
import numpy as np
from jax.experimental import pallas as pl
from jax.experimental.pallas import tpu as pltpu


def _round_up(v, m):
    return (v + m - 1) // m * m


def _cdiv(a, b):
    return (a + b - 1) // b


def _vmem_capacity_bytes():
    try:
        return int(pltpu.get_tpu_info().vmem_capacity_bytes)
    except Exception:
        return 64 << 20  # conservative fallback (v7x per-TC VMEM)


# ---------------------------------------------------------------------------
# Pallas kernel: one MXU matmul (bf16 in, f32 accumulate) + f32 bias epilogue.
#   x_ref : (tb, in_f)   current batch tile            (bf16)
#   w_ref : (in_f, tn)   effective weight tile         (bf16, resident if tn==out_pad)
#   b_ref : (1, tn)      bias tile                     (f32)
#   o_ref : (tb, tn)     lane-dense output tile        (f32)
# ---------------------------------------------------------------------------
def _projected_linear_kernel(x_ref, w_ref, b_ref, o_ref):
    y = jnp.dot(x_ref[...], w_ref[...], preferred_element_type=jnp.float32)
    o_ref[...] = (y + b_ref[...]).astype(o_ref.dtype)


# ---------------------------------------------------------------------------
# One-time weight preparation (module construction, NOT per-call):
# fold encoding+decoding into a single effective weight, pre-transpose it,
# lane-pad the output dim, and cast to the MXU input dtype.
# ---------------------------------------------------------------------------
def fold_projected_weights(arrangements, w_encs, w_dec, in_f,
                           dtype=jnp.bfloat16):
    """Return W_eff^T padded to (in_f, round_up(out_f, 128)) in `dtype`.

    forward(x) = decoding(encoding(x))
               = concat_i(x[:, arr_i] @ W_enc_i^T) @ W_dec^T + b
               = x @ W_eff^T + b,   W_eff[:, arr_i] += W_dec_i @ W_enc_i
    (".add" also covers overlapping arrangements correctly.)
    """
    out_f = w_dec.shape[0]
    w_eff = jnp.zeros((out_f, in_f), dtype=jnp.float32)
    off = 0
    for arr, w_enc in zip(arrangements, w_encs):
        j = w_enc.shape[0]
        w_eff = w_eff.at[:, arr].add(
            w_dec[:, off:off + j].astype(jnp.float32)
            @ w_enc.astype(jnp.float32))
        off += j
    out_pad = _round_up(out_f, 128)
    w_eff_t = jnp.zeros((in_f, out_pad), jnp.float32).at[:, :out_f].set(w_eff.T)
    return w_eff_t.astype(dtype)


def pad_bias(bias):
    out_f = bias.shape[0]
    out_pad = _round_up(out_f, 128)
    return jnp.zeros((1, out_pad), jnp.float32).at[0, :out_f].set(
        bias.astype(jnp.float32))


# ---------------------------------------------------------------------------
# Tile selection from a generation-aware VMEM budget.
# ---------------------------------------------------------------------------
def _choose_tiles(B, in_f, out_pad, x_bytes, w_bytes, out_bytes, budget):
    # Weight fully resident (single-buffered) when it is comfortably small;
    # otherwise tile over N (lane-dense multiples of 128, double-buffered).
    if in_f * out_pad * w_bytes <= budget // 3:
        tn, w_bufs = out_pad, 1
    else:
        w_bufs = 2
        tn = (budget // 3) // (w_bufs * in_f * w_bytes)
        tn = max(128, min(out_pad, (tn // 128) * 128))

    # Batch tile from the remaining budget (x and out are double-buffered).
    remaining = budget - w_bufs * (in_f * tn * w_bytes + tn * 4)
    per_row = 2 * (in_f * x_bytes + tn * out_bytes)
    tb_cap = max(8, min(2048, (remaining // per_row) // 8 * 8))
    tb = min(_round_up(B, 8), tb_cap)

    # v7x megacore: prefer >=4 batch steps so both TensorCores get work.
    if B >= 1024:
        tb = min(tb, max(256, _round_up(_cdiv(B, 4), 256)))
    return tb, tn, w_bufs


# ---------------------------------------------------------------------------
# Per-call forward: batch/N-tiled Pallas matmul with (near-)resident weights.
# ---------------------------------------------------------------------------
@functools.partial(jax.jit, static_argnames=("out_f",))
def projected_linear_forward(x, w_eff_t, bias2d, out_f):
    B, in_f = x.shape
    assert w_eff_t.shape[0] == in_f
    out_pad = w_eff_t.shape[1]

    x = x.astype(w_eff_t.dtype)  # bf16 MXU inputs (accumulation stays f32)
    x_bytes = x.dtype.itemsize
    w_bytes = w_eff_t.dtype.itemsize
    out_bytes = 4  # f32 output

    vmem_cap = _vmem_capacity_bytes()
    budget = int(0.7 * vmem_cap)
    tb, tn, w_bufs = _choose_tiles(B, in_f, out_pad,
                                   x_bytes, w_bytes, out_bytes, budget)
    n_b = _cdiv(B, tb)
    n_n = _cdiv(out_pad, tn)

    # Invariant weight/bias blocks -> single VMEM buffer; streamed -> default 2.
    if n_n == 1:
        w_spec = pl.BlockSpec((in_f, tn), lambda i, j: (0, j),
                              pipeline_mode=pl.Buffered(1))
        b_spec = pl.BlockSpec((1, tn), lambda i, j: (0, j),
                              pipeline_mode=pl.Buffered(1))
    else:
        w_spec = pl.BlockSpec((in_f, tn), lambda i, j: (0, j))
        b_spec = pl.BlockSpec((1, tn), lambda i, j: (0, j))

    # Precise VMEM estimate + headroom, capped at ~0.75 of physical VMEM.
    vmem_est = (2 * tb * in_f * x_bytes
                + w_bufs * (in_f * tn * w_bytes + tn * 4)
                + 2 * tb * tn * out_bytes)
    vmem_limit = int(min(max(vmem_est + (4 << 20), 8 << 20),
                         int(0.75 * vmem_cap)))

    cost = pl.CostEstimate(
        flops=2 * B * in_f * out_pad,
        transcendentals=0,
        bytes_accessed=(B * in_f * x_bytes + in_f * out_pad * w_bytes
                        + out_pad * 4 + B * out_pad * out_bytes),
    )

    out = pl.pallas_call(
        _projected_linear_kernel,
        out_shape=jax.ShapeDtypeStruct((B, out_pad), jnp.float32),
        grid_spec=pltpu.PrefetchScalarGridSpec(
            num_scalar_prefetch=0,
            grid=(n_b, n_n),
            in_specs=[
                pl.BlockSpec((tb, in_f), lambda i, j: (i, 0)),  # x tile
                w_spec,                                         # weight
                b_spec,                                         # bias
            ],
            out_specs=pl.BlockSpec((tb, tn), lambda i, j: (i, j)),
        ),
        compiler_params=pltpu.CompilerParams(
            dimension_semantics=("parallel", "parallel"),
            vmem_limit_bytes=vmem_limit,
        ),
        cost_estimate=cost,
    )(x, w_eff_t, bias2d)

    # Only the lane padding is sliced off; batch is never padded/sliced.
    return out[:, :out_f]


# ---------------------------------------------------------------------------
# Pure-JAX reference mirroring the torch module exactly (all f32):
# grouped encoding (gather + per-split linear, no bias) -> concat -> decoding.
# ---------------------------------------------------------------------------
def reference_forward(x, arrangements, w_encs, w_dec, bias):
    chunks = [jnp.take(x, arr, axis=1) @ we.T
              for arr, we in zip(arrangements, w_encs)]
    z = jnp.concatenate(chunks, axis=1)
    return z @ w_dec.T + bias[None, :]


if __name__ == "__main__":
    # Small shapes consistent with the module:
    #   in_f = 32, out_f = 16, k_splits = 2, j_ranks = [8, 8], batch = 8
    B, in_f, out_f = 8, 32, 16
    j_ranks = (8, 8)

    key = jax.random.PRNGKey(0)
    k_x, k_perm, k_e0, k_e1, k_d, k_b = jax.random.split(key, 6)

    x = jax.random.normal(k_x, (B, in_f), dtype=jnp.float32)

    # Arrangements: permutation of the input features, split into 2 groups.
    perm = jax.random.permutation(k_perm, in_f)
    arrangements = (perm[: in_f // 2].astype(jnp.int32),
                    perm[in_f // 2:].astype(jnp.int32))

    # Encoder weights w_enc_i: (j_ranks[i], len(arrangement_i)); no bias.
    w_enc0 = jax.random.normal(k_e0, (j_ranks[0], in_f // 2), jnp.float32) * 0.1
    w_enc1 = jax.random.normal(k_e1, (j_ranks[1], in_f // 2), jnp.float32) * 0.1
    w_encs = (w_enc0, w_enc1)

    # Decoder weight = cat([w_dec_i], dim=1): (out_f, sum(j_ranks)); with bias.
    w_dec = jax.random.normal(k_d, (out_f, sum(j_ranks)), jnp.float32) * 0.1
    bias = jax.random.normal(k_b, (out_f,), jnp.float32) * 0.1

    # One-time weight preparation (equivalent of module construction).
    w_eff_t = fold_projected_weights(arrangements, w_encs, w_dec, in_f)
    bias2d = pad_bias(bias)

    # Per-call forward via Pallas.
    y = projected_linear_forward(x, w_eff_t, bias2d, out_f)
    y = jax.block_until_ready(y)

    # Verify against the exact two-stage (encoding -> decoding) f32 semantics.
    # bf16 MXU inputs -> validate at bf16-appropriate tolerances.
    y_ref = reference_forward(x, arrangements, w_encs, w_dec, bias)
    np.testing.assert_allclose(np.asarray(y), np.asarray(y_ref),
                               rtol=2e-2, atol=2e-2)

    print("KERNEL_OK")
</pallas_src>

<mosaic_0001>
module attributes {stable_mosaic.version = 11 : i64} {
  func.func @_projected_linear_kernel(%arg0: i32, %arg1: i32, %arg2: memref<8x32xbf16, #tpu.memory_space<vmem>>, %arg3: memref<32x128xbf16, #tpu.memory_space<vmem>>, %arg4: memref<1x128xf32, #tpu.memory_space<vmem>>, %arg5: memref<8x128xf32, #tpu.memory_space<vmem>>) attributes {dimension_semantics = [#tpu.dimension_semantics<parallel>, #tpu.dimension_semantics<parallel>], iteration_bounds = array<i64: 1, 1>, scalar_prefetch = 0 : i64, scratch_operands = 0 : i64, tpu.core_type = #tpu.core_type<tc>, window_params = [{transform_indices = @transform_0, window_bounds = array<i64: 8, 32>}, {pipeline_mode = #tpu.pipeline_mode<synchronous>, transform_indices = @transform_1, window_bounds = array<i64: 32, 128>}, {pipeline_mode = #tpu.pipeline_mode<synchronous>, transform_indices = @transform_2, window_bounds = array<i64: 1, 128>}, {transform_indices = @transform_3, window_bounds = array<i64: 8, 128>}]} {
    %c0 = arith.constant 0 : index
    %c0_0 = arith.constant 0 : index
    %0 = vector.load %arg2[%c0, %c0_0] : memref<8x32xbf16, #tpu.memory_space<vmem>>, vector<8x32xbf16>
    %c0_1 = arith.constant 0 : index
    %c0_2 = arith.constant 0 : index
    %1 = vector.load %arg3[%c0_1, %c0_2] : memref<32x128xbf16, #tpu.memory_space<vmem>>, vector<32x128xbf16>
    %cst = arith.constant dense<0.000000e+00> : vector<8x128xf32>
    %2 = tpu.matmul %0, %1, %cst {dimension_numbers = #tpu.dot_dimension_numbers<[1], [0], [0], [1], [0, 0, 1, 1], [], []>} : vector<8x32xbf16>, vector<32x128xbf16>, vector<8x128xf32> -> vector<8x128xf32>
    %c0_3 = arith.constant 0 : index
    %c0_4 = arith.constant 0 : index
    %3 = vector.load %arg4[%c0_3, %c0_4] : memref<1x128xf32, #tpu.memory_space<vmem>>, vector<1x128xf32>
    %4 = vector.broadcast %3 : vector<1x128xf32> to vector<8x128xf32>
    %5 = arith.addf %2, %4 : vector<8x128xf32>
    %c0_5 = arith.constant 0 : index
    %c0_6 = arith.constant 0 : index
    %6 = vector.load %arg5[%c0_5, %c0_6] : memref<8x128xf32, #tpu.memory_space<vmem>>, vector<8x128xf32>
    tpu.vector_store %arg5[%c0_5, %c0_6], %5 {strides = array<i32>} : memref<8x128xf32, #tpu.memory_space<vmem>>, vector<8x128xf32>,
    return
  }
  func.func @transform_0(%arg0: i32, %arg1: i32) -> (i32, i32) {
    %c0_i32 = arith.constant 0 : i32
    %c0_i32_0 = arith.constant 0 : i32
    return %arg0, %c0_i32 : i32, i32
  }
  func.func @transform_1(%arg0: i32, %arg1: i32) -> (i32, i32) {
    %c0_i32 = arith.constant 0 : i32
    %c0_i32_0 = arith.constant 0 : i32
    return %c0_i32, %arg1 : i32, i32
  }
  func.func @transform_2(%arg0: i32, %arg1: i32) -> (i32, i32) {
    %c0_i32 = arith.constant 0 : i32
    %c0_i32_0 = arith.constant 0 : i32
    return %c0_i32, %arg1 : i32, i32
  }
  func.func @transform_3(%arg0: i32, %arg1: i32) -> (i32, i32) {
    %c0_i32 = arith.constant 0 : i32
    return %arg0, %arg1 : i32, i32
  }
}

</mosaic_0001>

<llo_original>
// kernel: projected_linear_forward.1
$region0: #{projected_linear_forward.1}
  #allocation0 [shape = 'u32[]', space=smem, size = 0x4, offset = 0x4, fixed_abs, tag = 'smem constant byte address 0x4 - core index']
  #allocation1 [shape = 'u32[144,128]{1,0:T(1,128)}', space=vmem, size = 0x12000, scoped, tag = 'internal scratch']
  %s0 = inlined_call_operand.vmem [shape: bf16[8,32], index: 0, kind: input, shape index: {}]
  %s1 = inlined_call_operand.hbm [shape: bf16[32,128], index: 1, kind: input, shape index: {}]
  %s2 = inlined_call_operand.vmem [shape: f32[1,128], index: 2, kind: input, shape index: {}]
  %s3 = inlined_call_operand.hbm [shape: f32[8,128], index: 3, kind: output, shape index: {}]
  %s4 = sld [smem:[#allocation0]]
  $region26: #{projected_linear_forward.1} parent=0
    _
  %s6 = ssub.s32 1, %s4
  %s7 = scalar_select 0, %s6, %s4
  $region1: #{projected_linear_forward.1} parent=0
    #allocation2 [shape = 'u8[8192]{0}', space=vmem, size = 0x2000, scoped, tag = 'input window, operand 1, single buffered']
    #allocation3 [shape = 's32[1]{0}', space=sflag, size = 0x4, scoped, tag = 'scoped memory for projected_linear_forward.1']
    #allocation4 [shape = 's32[1]{0}', space=sflag, size = 0x4, scoped, tag = 'scoped memory for projected_linear_forward.1']
    #allocation5 [shape = 'u8[4096]{0}', space=vmem, size = 0x1000, scoped, tag = 'output window, operand 0, single buffered']
    %8 = vsyncpa [#allocation3], 0
    %9 = vsyncpa [#allocation4], 0
    // Predicated region
    $region2: #{projected_linear_forward.1} parent=1 // pred_check
      _
    $region3: #{projected_linear_forward.1} parent=1 // pred_check_branch
      %11 = sbr.rel (0) target = $region5
    $region4: #{projected_linear_forward.1} parent=1 // pred_region
      _
    $region5: #{projected_linear_forward.1} parent=1 // pred_fallthru
      _
    // Predicated region
    $region6: #{projected_linear_forward.1} parent=1 // pred_check
      _
    $region7: #{projected_linear_forward.1} parent=1 // pred_check_branch
      %13 = sbr.rel (0) target = $region9
    $region8: #{projected_linear_forward.1} parent=1 // pred_region
      %s15 = ssub.s32 256, 256
      %16 = vsyncadd [#allocation3], %s15
      %s17 = sshll.u32 [#allocation2], 4
      %s18 = int_to_ptr.vmem [resolvable:$true] %s17
      %23 = dma.hbm_to_vmem [thread:$0]  %s1, 256, %s18, [#allocation3], 64, 64, 4
    $region9: #{projected_linear_forward.1} parent=1 // pred_fallthru
      _
    // Predicated region
    $region10: #{projected_linear_forward.1} parent=1 // pred_check
      _
    $region11: #{projected_linear_forward.1} parent=1 // pred_check_branch
      %25 = sbr.rel (0) target = $region13
    $region12: #{projected_linear_forward.1} parent=1 // pred_region
      _
    $region13: #{projected_linear_forward.1} parent=1 // pred_fallthru
      _
    // Predicated region
    $region14: #{projected_linear_forward.1} parent=1 // pred_check
      _
    $region15: #{projected_linear_forward.1} parent=1 // pred_check_branch
      %27 = sbr.rel (0) target = $region17
    $region16: #{projected_linear_forward.1} parent=1 // pred_region
      %28 = dma.done [#allocation3], 256
    $region17: #{projected_linear_forward.1} parent=1 // pred_fallthru
      _
    %v30 = vld [vmem:[%s0] sm:$0xf]
    %v31 = vld [vmem:[#allocation2] sm:$0xf]
    %v32 = vld [vmem:[#allocation2 + $0x4] sm:$0xf]
    %v33 = vld [vmem:[#allocation2 + $0x8] sm:$0xf]
    %v34 = vld [vmem:[#allocation2 + $0xc] sm:$0xf]
    %v35 = vld [vmem:[%s2] sm:$0x1]
    %v37 = vlaneseq
    %v38 = vshrl.u32 %v37, 7
    %v39 = vsub.s32 0, %v38
    %v40 = vrot.slane %v35, %v39
    %v46 = vunpack.c.l.b16 %v31
    %v47 = vunpack.c.l.b16 %v32
    %v48 = vunpack.c.l.b16 %v33
    %v49 = vunpack.c.l.b16 %v34
    %v50 = vpack.c.b16 %v47, %v46
    %v51 = vpack.c.b16 %v49, %v48
    %vm54 = vcmask 261120
    %v56 = vsel %vm54, %v30, 0
    %58 = vmatprep.subr.bf16.mxu0 0
    %59 = vmatpush1.bf16.msra.mxu0 %v50
    %60 = vmatprep.subr.bf16.mxu0 0
    %61 = vmatpush1.bf16.msra.mxu0 %v51
    %62 = vmatprep.subr.bf16.mxu0 0
    %63 = vmatpush1.bf16.msra.mxu0 0
    %64 = vmatprep.subr.bf16.mxu0 0
    %65 = vmatpush1.bf16.msra.mxu0 0
    %66 = vmatprep.subr.bf16.mxu0 0
    %67 = vmatpush1.bf16.msra.mxu0 0
    %68 = vmatprep.subr.bf16.mxu0 0
    %69 = vmatpush1.bf16.msra.mxu0 0
    %70 = vmatprep.subr.bf16.mxu0 0
    %71 = vmatpush1.bf16.msra.mxu0 0
    %72 = vmatprep.subr.bf16.mxu0 0
    %73 = vmatpush1.bf16.msra.mxu0 0
    %74 = vmatprep.subr.bf16.mxu0 0
    %75 = vmatpush1.bf16.msra.mxu0 0
    %76 = vmatprep.subr.bf16.mxu0 0
    %77 = vmatpush1.bf16.msra.mxu0 0
    %78 = vmatprep.subr.bf16.mxu0 0
    %79 = vmatpush1.bf16.msra.mxu0 0
    %80 = vmatprep.subr.bf16.mxu0 0
    %81 = vmatpush1.bf16.msra.mxu0 0
    %82 = vmatprep.subr.bf16.mxu0 0
    %83 = vmatpush1.bf16.msra.mxu0 0
    %84 = vmatprep.subr.bf16.mxu0 0
    %85 = vmatpush1.bf16.msra.mxu0 0
    %86 = vmatprep.subr.bf16.mxu0 0
    %87 = vmatpush1.bf16.msra.mxu0 0
    %88 = vmatprep.subr.bf16.mxu0 0
    %89 = vmatpush1.bf16.msra.mxu0 0
    %90 = vmatprep.mubr.bf16.mxu0 0
    %91 = vmatmul.mubr.bf16.gmra.mrb[0].mxu0 %v56
    %v92 = vpop.f32.mrb[0].mxu0
    %v93 = vadd.f32 %v40, %v92
    %v94 = vpop.f32.mrb[0].mxu0
    %v95 = vpop.f32.mrb[0].mxu0
    %v96 = vpop.f32.mrb[0].mxu0
    %97 = vdwg.mxu0
    %98 = vst [vmem:[#allocation5] sm:$0xff] %v93
    // Predicated region
    $region18: #{projected_linear_forward.1} parent=1 // pred_check
      _
    $region19: #{projected_linear_forward.1} parent=1 // pred_check_branch
      %100 = sbr.rel (0) target = $region21
    $region20: #{projected_linear_forward.1} parent=1 // pred_region
      %s102 = ssub.s32 128, 128
      %103 = vsyncadd [#allocation4], %s102
      %s105 = sshll.u32 [#allocation5], 4
      %s106 = int_to_ptr.vmem [resolvable:$true] %s105
      %108 = dma.vmem_to_hbm [thread:$0]  %s106, 128, %s3, [#allocation4]
    $region21: #{projected_linear_forward.1} parent=1 // pred_fallthru
      _
    // Predicated region
    $region22: #{projected_linear_forward.1} parent=1 // pred_check
      _
    $region23: #{projected_linear_forward.1} parent=1 // pred_check_branch
      %110 = sbr.rel (0) target = $region25
    $region24: #{projected_linear_forward.1} parent=1 // pred_region
      %111 = dma.done [#allocation4], 128
    $region25: #{projected_linear_forward.1} parent=1 // pred_fallthru
      _
    %112 = vsyncpa [#allocation3], 1
    %113 = vsyncpa [#allocation4], 1

</llo_original>
